<compile_context>
chip_gen: v6e
topology: v6e:2x2x1
jax: 0.10.0
libtpu: 0.0.40
codegen_flags: <defaults>
</compile_context>

<pallas_src>
import functools

import jax
import jax.numpy as jnp
from jax.experimental import pallas as pl
from jax.experimental.pallas import tpu as pltpu


def _round_up(x: int, m: int) -> int:
    return ((x + m - 1) // m) * m


# --------------------------------------------------------------------------- kernel
def _hybrid_proj_kernel(g_ref, s_ref, wg_ref, ws_ref, o_ref, *, compute_dtype):
    # g_ref:  (tile, fold*Dg)   caller dtype (f32); cast to bf16 on the VPU in-kernel
    # s_ref:  (tile, fold*Ds)   caller dtype (f32)
    # wg_ref: (fold*Dg, fold*Dout)  compute dtype, grid-invariant (block-diagonal Wg)
    # ws_ref: (fold*Ds, fold*Dout)  compute dtype, grid-invariant (block-diagonal Ws)
    # o_ref:  (tile, fold*Dout)     lane-dense output (fold*Dout % 128 == 0 when folded)
    g = g_ref[...].astype(compute_dtype)
    s = s_ref[...].astype(compute_dtype)
    acc = jnp.dot(g, wg_ref[...], preferred_element_type=jnp.float32)
    acc = acc + jnp.dot(s, ws_ref[...], preferred_element_type=jnp.float32)
    o_ref[...] = acc.astype(o_ref.dtype)


# ------------------------------------------------------------------ layout helpers
def _pick_fold(n_rows: int, d_out: int, lane: int = 128, max_fold: int = 8) -> int:
    """Smallest power-of-two fold f dividing n_rows with (f*d_out) % 128 == 0."""
    f = 1
    while f <= max_fold:
        if n_rows % f == 0 and (f * d_out) % lane == 0:
            return f
        f *= 2
    return 1  # fallback: no fold; output width == true d_out (full-dim block, masked vst)


def _block_diag_repeat(w, fold: int):
    """fold copies of w [k, n] on the diagonal -> [fold*k, fold*n]."""
    if fold == 1:
        return w
    k, n = w.shape
    eye = jnp.eye(fold, dtype=w.dtype)
    return jnp.einsum("ij,ab->iajb", eye, w).reshape(fold * k, fold * n)


def _num_tensorcores() -> int:
    """Best-effort TensorCores-per-chip query (v7x has 2); default 1 if unknown."""
    try:
        info = pltpu.get_tpu_info()
    except Exception:
        return 1
    for attr in ("num_cores", "num_tensorcores", "tensorcore_count", "cores_per_chip"):
        v = getattr(info, attr, None)
        if isinstance(v, int) and v > 0:
            return v
    return 1


def _pick_row_tile(n_rows_f: int, requested: int, *, align: int = 16,
                   n_cores: int = 1) -> int:
    requested = max(align, (requested // align) * align)
    if n_cores > 1 and n_rows_f > align:
        # Keep >= n_cores grid steps so the "parallel" axis shards across TensorCores.
        per_core = _round_up(pl.cdiv(n_rows_f, n_cores), align)
        requested = min(requested, per_core)
    if n_rows_f <= requested:
        return n_rows_f  # one full-extent block (block dim == full array dim is legal)
    return requested     # aligned tile; ragged tail handled by a masked block


# ------------------------------------------------------------------ weight prep
def prepare_projection_weights(proj_weight, d_g: int, n_rows: int, *,
                               compute_dtype=jnp.bfloat16):
    """One-time prep of the nn.Linear(bias=False) weight.

    proj_weight: [Dout, Dg + Ds] (torch nn.Linear layout).
    Returns (wg, ws, fold, d_out) where wg/ws are the (possibly block-diagonal,
    row-folded) halves of W^T in compute_dtype.
    """
    proj_weight = jnp.asarray(proj_weight)
    d_out = proj_weight.shape[0]
    fold = _pick_fold(n_rows, d_out)
    w_t = proj_weight.T.astype(compute_dtype)         # y = concat([g, s]) @ W^T
    wg = _block_diag_repeat(w_t[:d_g], fold)           # [fold*Dg, fold*Dout]
    ws = _block_diag_repeat(w_t[d_g:], fold)           # [fold*Ds, fold*Dout]
    return wg, ws, fold, d_out


# ------------------------------------------------------------------ projection call
def hybrid_variable_projection(graph_var_enc, seq_var_enc, wg, ws, *, fold, d_out,
                               row_tile=1024, compute_dtype=jnp.bfloat16,
                               out_dtype=None, num_cores=None):
    """variable_encoding = concat([g, s], -1) @ W.T as one fused Pallas matmul."""
    B, N, Dg = graph_var_enc.shape
    Bs, Ns, Ds = seq_var_enc.shape
    assert (B, N) == (Bs, Ns), "graph/seq variable encodings must align"

    R = B * N
    assert R % fold == 0, "fold chosen by prepare_projection_weights must divide B*N"
    Kg, Nf = wg.shape
    Ks, Nf2 = ws.shape
    assert Kg == fold * Dg and Ks == fold * Ds and Nf == Nf2 == fold * d_out

    R_f = R // fold
    # Pure metadata reshapes of contiguous arrays — no extra HBM pass, no dtype cast.
    g2 = graph_var_enc.reshape(R_f, Kg)
    s2 = seq_var_enc.reshape(R_f, Ks)

    if out_dtype is None:
        out_dtype = jnp.promote_types(graph_var_enc.dtype, seq_var_enc.dtype)

    n_cores = num_cores if num_cores is not None else _num_tensorcores()
    tile = _pick_row_tile(R_f, row_tile, n_cores=n_cores)
    grid = (pl.cdiv(R_f, tile),)

    # Exact VMEM need (double-buffered activation/output tiles + weights) + headroom,
    # capped at 32 MiB (v7x physical VMEM is only 64 MiB per TensorCore).
    g_bytes = jnp.dtype(g2.dtype).itemsize
    s_bytes = jnp.dtype(s2.dtype).itemsize
    w_bytes = jnp.dtype(wg.dtype).itemsize
    o_bytes = jnp.dtype(out_dtype).itemsize
    need = (2 * tile * Kg * g_bytes
            + 2 * tile * Ks * s_bytes
            + 2 * (Kg + Ks) * Nf * w_bytes
            + 2 * tile * Nf * o_bytes)
    vmem_limit = int(min(max(need + (4 << 20), 8 << 20), 32 << 20))

    out = pl.pallas_call(
        functools.partial(_hybrid_proj_kernel, compute_dtype=compute_dtype),
        out_shape=jax.ShapeDtypeStruct((R_f, Nf), out_dtype),
        grid_spec=pltpu.PrefetchScalarGridSpec(
            num_scalar_prefetch=0,
            grid=grid,
            in_specs=[
                pl.BlockSpec((tile, Kg), lambda i: (i, 0)),
                pl.BlockSpec((tile, Ks), lambda i: (i, 0)),
                # Grid-invariant weights: block index never changes, so they are
                # DMA'd once and reused across all grid steps.
                pl.BlockSpec((Kg, Nf), lambda i: (0, 0)),
                pl.BlockSpec((Ks, Nf), lambda i: (0, 0)),
            ],
            out_specs=pl.BlockSpec((tile, Nf), lambda i: (i, 0)),
        ),
        compiler_params=pltpu.CompilerParams(
            dimension_semantics=("parallel",),
            vmem_limit_bytes=vmem_limit,
        ),
    )(g2, s2, wg, ws)

    return out.reshape(B, N, d_out)


def hybrid_encoder_variable_encoding(graph_var_enc, seq_var_enc, proj_weight=None, *,
                                     hybrid_method="linear_proj", row_tile=1024,
                                     compute_dtype=jnp.bfloat16, out_dtype=None):
    """Mirrors HybridEncoder.forward()'s variable_encoding computation."""
    if hybrid_method == "concat":
        return jnp.concatenate([graph_var_enc, seq_var_enc], axis=-1)
    assert hybrid_method == "linear_proj" and proj_weight is not None
    B, N, Dg = graph_var_enc.shape
    wg, ws, fold, d_out = prepare_projection_weights(
        proj_weight, Dg, B * N, compute_dtype=compute_dtype)
    return hybrid_variable_projection(
        graph_var_enc, seq_var_enc, wg, ws, fold=fold, d_out=d_out,
        row_tile=row_tile, compute_dtype=compute_dtype, out_dtype=out_dtype)


if __name__ == "__main__":
    # Small deterministic shapes consistent with the module config:
    #   seq_encoder.source_encoding_size = 32, graph gnn hidden = 32, output = 32.
    B, N = 2, 8
    Dg, Ds, Dout = 32, 32, 32

    key = jax.random.PRNGKey(0)
    kg, ks, kw = jax.random.split(key, 3)

    graph_var_enc = jax.random.normal(kg, (B, N, Dg), dtype=jnp.float32)
    seq_var_enc = jax.random.normal(ks, (B, N, Ds), dtype=jnp.float32)
    # nn.Linear(Dg + Ds, Dout, bias=False) weight: [Dout, Dg + Ds]
    proj_weight = jax.random.normal(kw, (Dout, Dg + Ds), dtype=jnp.float32) * 0.05

    # One-time weight prep (block-diag fold, transpose, cast) hoisted out of the
    # per-call hot path; jit the projection itself.
    wg, ws, fold, d_out = prepare_projection_weights(proj_weight, Dg, B * N)
    run = jax.jit(functools.partial(hybrid_variable_projection, fold=fold, d_out=d_out))

    variable_encoding = jax.block_until_ready(
        run(graph_var_enc, seq_var_enc, wg, ws))

    # References: bf16-rounded math (matches the kernel's MXU path) and exact f32 math.
    cat = jnp.concatenate([graph_var_enc, seq_var_enc], axis=-1)
    ref_f32 = cat @ proj_weight.T
    ref_bf16 = (cat.astype(jnp.bfloat16).astype(jnp.float32)
                @ proj_weight.T.astype(jnp.bfloat16).astype(jnp.float32))

    assert variable_encoding.shape == (B, N, Dout)
    assert jnp.allclose(variable_encoding, ref_bf16, atol=1e-2, rtol=1e-2)
    assert jnp.allclose(variable_encoding, ref_f32, atol=1e-1, rtol=1e-1)

    # Also exercise the 'concat' hybrid_method branch (pure jnp, no kernel needed).
    cat_out = hybrid_encoder_variable_encoding(
        graph_var_enc, seq_var_enc, hybrid_method="concat")
    assert cat_out.shape == (B, N, Dg + Ds)

    # Same kind of context_encoding dict the torch module returns (structural parity).
    context_encoding = dict(
        batch_size=B,
        variable_encoding=variable_encoding,
        graph_encoding_result={"variable_encoding": graph_var_enc},
        seq_encoding_result={"variable_encoding": seq_var_enc},
    )
    _ = context_encoding

    print("KERNEL_OK")
</pallas_src>

<mosaic_0001>
module attributes {stable_mosaic.version = 11 : i64} {
  func.func @_hybrid_proj_kernel(%arg0: i32, %arg1: memref<4x128xf32, #tpu.memory_space<vmem>>, %arg2: memref<4x128xf32, #tpu.memory_space<vmem>>, %arg3: memref<128x128xbf16, #tpu.memory_space<vmem>>, %arg4: memref<128x128xbf16, #tpu.memory_space<vmem>>, %arg5: memref<4x128xf32, #tpu.memory_space<vmem>>) attributes {dimension_semantics = [#tpu.dimension_semantics<parallel>], iteration_bounds = array<i64: 1>, scalar_prefetch = 0 : i64, scratch_operands = 0 : i64, tpu.core_type = #tpu.core_type<tc>, window_params = [{transform_indices = @transform_0, window_bounds = array<i64: 4, 128>}, {transform_indices = @transform_1, window_bounds = array<i64: 4, 128>}, {pipeline_mode = #tpu.pipeline_mode<synchronous>, transform_indices = @transform_2, window_bounds = array<i64: 128, 128>}, {pipeline_mode = #tpu.pipeline_mode<synchronous>, transform_indices = @transform_3, window_bounds = array<i64: 128, 128>}, {transform_indices = @transform_4, window_bounds = array<i64: 4, 128>}]} {
    %c0 = arith.constant 0 : index
    %c0_0 = arith.constant 0 : index
    %0 = vector.load %arg1[%c0, %c0_0] : memref<4x128xf32, #tpu.memory_space<vmem>>, vector<4x128xf32>
    %1 = arith.truncf %0 : vector<4x128xf32> to vector<4x128xbf16>
    %c0_1 = arith.constant 0 : index
    %c0_2 = arith.constant 0 : index
    %2 = vector.load %arg2[%c0_1, %c0_2] : memref<4x128xf32, #tpu.memory_space<vmem>>, vector<4x128xf32>
    %3 = arith.truncf %2 : vector<4x128xf32> to vector<4x128xbf16>
    %c0_3 = arith.constant 0 : index
    %c0_4 = arith.constant 0 : index
    %4 = vector.load %arg3[%c0_3, %c0_4] : memref<128x128xbf16, #tpu.memory_space<vmem>>, vector<128x128xbf16>
    %cst = arith.constant dense<0.000000e+00> : vector<4x128xf32>
    %5 = tpu.matmul %1, %4, %cst {dimension_numbers = #tpu.dot_dimension_numbers<[1], [0], [0], [1], [0, 0, 1, 1], [], []>} : vector<4x128xbf16>, vector<128x128xbf16>, vector<4x128xf32> -> vector<4x128xf32>
    %c0_5 = arith.constant 0 : index
    %c0_6 = arith.constant 0 : index
    %6 = vector.load %arg4[%c0_5, %c0_6] : memref<128x128xbf16, #tpu.memory_space<vmem>>, vector<128x128xbf16>
    %cst_7 = arith.constant dense<0.000000e+00> : vector<4x128xf32>
    %7 = tpu.matmul %3, %6, %cst_7 {dimension_numbers = #tpu.dot_dimension_numbers<[1], [0], [0], [1], [0, 0, 1, 1], [], []>} : vector<4x128xbf16>, vector<128x128xbf16>, vector<4x128xf32> -> vector<4x128xf32>
    %8 = arith.addf %5, %7 : vector<4x128xf32>
    %c0_8 = arith.constant 0 : index
    %c0_9 = arith.constant 0 : index
    %9 = vector.load %arg5[%c0_8, %c0_9] : memref<4x128xf32, #tpu.memory_space<vmem>>, vector<4x128xf32>
    tpu.vector_store %arg5[%c0_8, %c0_9], %8 {strides = array<i32>} : memref<4x128xf32, #tpu.memory_space<vmem>>, vector<4x128xf32>,
    return
  }
  func.func @transform_0(%arg0: i32) -> (i32, i32) {
    %c0_i32 = arith.constant 0 : i32
    %c0_i32_0 = arith.constant 0 : i32
    return %arg0, %c0_i32 : i32, i32
  }
  func.func @transform_1(%arg0: i32) -> (i32, i32) {
    %c0_i32 = arith.constant 0 : i32
    %c0_i32_0 = arith.constant 0 : i32
    return %arg0, %c0_i32 : i32, i32
  }
  func.func @transform_2(%arg0: i32) -> (i32, i32) {
    %c0_i32 = arith.constant 0 : i32
    %c0_i32_0 = arith.constant 0 : i32
    %c0_i32_1 = arith.constant 0 : i32
    return %c0_i32, %c0_i32_0 : i32, i32
  }
  func.func @transform_3(%arg0: i32) -> (i32, i32) {
    %c0_i32 = arith.constant 0 : i32
    %c0_i32_0 = arith.constant 0 : i32
    %c0_i32_1 = arith.constant 0 : i32
    return %c0_i32, %c0_i32_0 : i32, i32
  }
  func.func @transform_4(%arg0: i32) -> (i32, i32) {
    %c0_i32 = arith.constant 0 : i32
    %c0_i32_0 = arith.constant 0 : i32
    return %arg0, %c0_i32 : i32, i32
  }
}

</mosaic_0001>

<llo_original>
// kernel: hybrid_variable_projection.1
$region0: #{hybrid_variable_projection.1}
  #allocation0 [shape = 'u32[]', space=smem, size = 0x4, offset = 0x4, fixed_abs, tag = 'smem constant byte address 0x4 - core index']
  #allocation1 [shape = 'u32[144,128]{1,0:T(1,128)}', space=vmem, size = 0x12000, scoped, tag = 'internal scratch']
  %s0 = inlined_call_operand.vmem [shape: f32[4,128], index: 0, kind: input, shape index: {}]
  %s1 = inlined_call_operand.vmem [shape: f32[4,128], index: 1, kind: input, shape index: {}]
  %s2 = inlined_call_operand.hbm [shape: bf16[128,128], index: 2, kind: input, shape index: {}]
  %s3 = inlined_call_operand.hbm [shape: bf16[128,128], index: 3, kind: input, shape index: {}]
  %s4 = inlined_call_operand.vmem [shape: f32[4,128], index: 4, kind: output, shape index: {}]
  %s5 = sld [smem:[#allocation0]]
  $region34: #{hybrid_variable_projection.1} parent=0
    _
  %s7 = ssub.s32 1, %s5
  %s8 = scalar_select 0, %s7, %s5
  $region1: #{hybrid_variable_projection.1} parent=0
    #allocation2 [shape = 'u8[32768]{0}', space=vmem, size = 0x8000, scoped, tag = 'input window, operand 2, single buffered']
    #allocation3 [shape = 's32[1]{0}', space=sflag, size = 0x4, scoped, tag = 'scoped memory for hybrid_variable_projection.1']
    #allocation4 [shape = 'u8[32768]{0}', space=vmem, size = 0x8000, scoped, tag = 'input window, operand 3, single buffered']
    #allocation5 [shape = 's32[1]{0}', space=sflag, size = 0x4, scoped, tag = 'scoped memory for hybrid_variable_projection.1']
    %9 = vsyncpa [#allocation3], 0
    %10 = vsyncpa [#allocation5], 0
    // Predicated region
    $region2: #{hybrid_variable_projection.1} parent=1 // pred_check
      _
    $region3: #{hybrid_variable_projection.1} parent=1 // pred_check_branch
      %12 = sbr.rel (0) target = $region5
    $region4: #{hybrid_variable_projection.1} parent=1 // pred_region
      _
    $region5: #{hybrid_variable_projection.1} parent=1 // pred_fallthru
      _
    // Predicated region
    $region6: #{hybrid_variable_projection.1} parent=1 // pred_check
      _
    $region7: #{hybrid_variable_projection.1} parent=1 // pred_check_branch
      %14 = sbr.rel (0) target = $region9
    $region8: #{hybrid_variable_projection.1} parent=1 // pred_region
      _
    $region9: #{hybrid_variable_projection.1} parent=1 // pred_fallthru
      _
    // Predicated region
    $region10: #{hybrid_variable_projection.1} parent=1 // pred_check
      _
    $region11: #{hybrid_variable_projection.1} parent=1 // pred_check_branch
      %16 = sbr.rel (0) target = $region13
    $region12: #{hybrid_variable_projection.1} parent=1 // pred_region
      %s18 = ssub.s32 1024, 1024
      %19 = vsyncadd [#allocation3], %s18
      %s20 = sshll.u32 [#allocation2], 4
      %s21 = int_to_ptr.vmem [resolvable:$true] %s20
      %26 = dma.hbm_to_vmem [thread:$0]  %s2, 1024, %s21, [#allocation3], 64, 64, 4
    $region13: #{hybrid_variable_projection.1} parent=1 // pred_fallthru
      _
    // Predicated region
    $region14: #{hybrid_variable_projection.1} parent=1 // pred_check
      _
    $region15: #{hybrid_variable_projection.1} parent=1 // pred_check_branch
      %28 = sbr.rel (0) target = $region17
    $region16: #{hybrid_variable_projection.1} parent=1 // pred_region
      %s30 = ssub.s32 1024, 1024
      %31 = vsyncadd [#allocation5], %s30
      %s32 = sshll.u32 [#allocation4], 4
      %s33 = int_to_ptr.vmem [resolvable:$true] %s32
      %38 = dma.hbm_to_vmem [thread:$0]  %s3, 1024, %s33, [#allocation5], 64, 64, 4
    $region17: #{hybrid_variable_projection.1} parent=1 // pred_fallthru
      _
    // Predicated region
    $region18: #{hybrid_variable_projection.1} parent=1 // pred_check
      _
    $region19: #{hybrid_variable_projection.1} parent=1 // pred_check_branch
      %40 = sbr.rel (0) target = $region21
    $region20: #{hybrid_variable_projection.1} parent=1 // pred_region
      %41 = dma.done [#allocation3], 1024
    $region21: #{hybrid_variable_projection.1} parent=1 // pred_fallthru
      _
    // Predicated region
    $region22: #{hybrid_variable_projection.1} parent=1 // pred_check
      _
    $region23: #{hybrid_variable_projection.1} parent=1 // pred_check_branch
      %43 = sbr.rel (0) target = $region25
    $region24: #{hybrid_variable_projection.1} parent=1 // pred_region
      %44 = dma.done [#allocation5], 1024
    $region25: #{hybrid_variable_projection.1} parent=1 // pred_fallthru
      _
    %v46 = vld [vmem:[%s0] sm:$0xf]
    %v47 = vpack.c.bf16 %v46, %v46
    %v48 = vld [vmem:[%s1] sm:$0xf]
    %v49 = vpack.c.bf16 %v48, %v48
    %v50 = vld [vmem:[#allocation2] sm:$0xf]
    %v51 = vld [vmem:[#allocation2 + $0x4] sm:$0xf]
    %v52 = vld [vmem:[#allocation2 + $0x8] sm:$0xf]
    %v53 = vld [vmem:[#allocation2 + $0xc] sm:$0xf]
    %v54 = vld [vmem:[#allocation2 + $0x10] sm:$0xf]
    %v55 = vld [vmem:[#allocation2 + $0x14] sm:$0xf]
    %v56 = vld [vmem:[#allocation2 + $0x18] sm:$0xf]
    %v57 = vld [vmem:[#allocation2 + $0x1c] sm:$0xf]
    %v58 = vld [vmem:[#allocation2 + $0x20] sm:$0xf]
    %v59 = vld [vmem:[#allocation2 + $0x24] sm:$0xf]
    %v60 = vld [vmem:[#allocation2 + $0x28] sm:$0xf]
    %v61 = vld [vmem:[#allocation2 + $0x2c] sm:$0xf]
    %v62 = vld [vmem:[#allocation2 + $0x30] sm:$0xf]
    %v63 = vld [vmem:[#allocation2 + $0x34] sm:$0xf]
    %v64 = vld [vmem:[#allocation2 + $0x38] sm:$0xf]
    %v65 = vld [vmem:[#allocation2 + $0x3c] sm:$0xf]
    %v66 = vld [vmem:[#allocation4] sm:$0xf]
    %v67 = vld [vmem:[#allocation4 + $0x4] sm:$0xf]
    %v68 = vld [vmem:[#allocation4 + $0x8] sm:$0xf]
    %v69 = vld [vmem:[#allocation4 + $0xc] sm:$0xf]
    %v70 = vld [vmem:[#allocation4 + $0x10] sm:$0xf]
    %v71 = vld [vmem:[#allocation4 + $0x14] sm:$0xf]
    %v72 = vld [vmem:[#allocation4 + $0x18] sm:$0xf]
    %v73 = vld [vmem:[#allocation4 + $0x1c] sm:$0xf]
    %v74 = vld [vmem:[#allocation4 + $0x20] sm:$0xf]
    %v75 = vld [vmem:[#allocation4 + $0x24] sm:$0xf]
    %v76 = vld [vmem:[#allocation4 + $0x28] sm:$0xf]
    %v77 = vld [vmem:[#allocation4 + $0x2c] sm:$0xf]
    %v78 = vld [vmem:[#allocation4 + $0x30] sm:$0xf]
    %v79 = vld [vmem:[#allocation4 + $0x34] sm:$0xf]
    %v80 = vld [vmem:[#allocation4 + $0x38] sm:$0xf]
    %v81 = vld [vmem:[#allocation4 + $0x3c] sm:$0xf]
    %v98 = vunpack.c.l.b16 %v66
    %v99 = vunpack.c.l.b16 %v67
    %v100 = vunpack.c.l.b16 %v68
    %v101 = vunpack.c.l.b16 %v69
    %v102 = vunpack.c.l.b16 %v70
    %v103 = vunpack.c.l.b16 %v71
    %v104 = vunpack.c.l.b16 %v72
    %v105 = vunpack.c.l.b16 %v73
    %v106 = vunpack.c.l.b16 %v74
    %v107 = vunpack.c.l.b16 %v75
    %v108 = vunpack.c.l.b16 %v76
    %v109 = vunpack.c.l.b16 %v77
    %v110 = vunpack.c.l.b16 %v78
    %v111 = vunpack.c.l.b16 %v79
    %v112 = vunpack.c.l.b16 %v80
    %v113 = vunpack.c.l.b16 %v81
    %v114 = vpack.c.b16 %v99, %v98
    %v115 = vpack.c.b16 %v101, %v100
    %v116 = vpack.c.b16 %v103, %v102
    %v117 = vpack.c.b16 %v105, %v104
    %v118 = vpack.c.b16 %v107, %v106
    %v119 = vpack.c.b16 %v109, %v108
    %v120 = vpack.c.b16 %v111, %v110
    %v121 = vpack.c.b16 %v113, %v112
    %130 = vmatprep.subr.bf16.mxu0 0
    %131 = vmatpush1.bf16.msra.mxu0 %v121
    %132 = vmatprep.subr.bf16.mxu0 0
    %133 = vmatpush1.bf16.msra.mxu0 %v120
    %134 = vmatprep.subr.bf16.mxu0 0
    %135 = vmatpush1.bf16.msra.mxu0 %v119
    %136 = vmatprep.subr.bf16.mxu0 0
    %137 = vmatpush1.bf16.msra.mxu0 %v118
    %138 = vmatprep.subr.bf16.mxu0 0
    %139 = vmatpush1.bf16.msra.mxu0 %v117
    %140 = vmatprep.subr.bf16.mxu0 0
    %141 = vmatpush1.bf16.msra.mxu0 %v116
    %142 = vmatprep.subr.bf16.mxu0 0
    %143 = vmatpush1.bf16.msra.mxu0 %v115
    %144 = vmatprep.subr.bf16.mxu0 0
    %145 = vmatpush1.bf16.msra.mxu0 %v114
    %146 = vmatprep.subr.bf16.mxu0 0
    %147 = vmatpush2.bf16.msra.mxu0 0
    %148 = vmatprep.subr.bf16.mxu0 0
    %149 = vmatpush2.bf16.msra.mxu0 0
    %150 = vmatprep.subr.bf16.mxu0 0
    %151 = vmatpush2.bf16.msra.mxu0 0
    %152 = vmatprep.subr.bf16.mxu0 0
    %153 = vmatpush2.bf16.msra.mxu0 0
    %154 = vmatprep.subr.bf16.mxu0 0
    %155 = vmatpush2.bf16.msra.mxu0 0
    %156 = vmatprep.subr.bf16.mxu0 0
    %157 = vmatpush2.bf16.msra.mxu0 0
    %158 = vmatprep.subr.bf16.mxu0 0
    %159 = vmatpush2.bf16.msra.mxu0 0
    %160 = vmatprep.subr.bf16.mxu0 0
    %161 = vmatpush2.bf16.msra.mxu0 0
    %162 = vmatprep.mubr.bf16.mxu0 0
    %163 = vmatmul.mubr.bf16.gmra.mxu0 %v49
    %v164 = vpop.f32.mrf.mxu0
    %v165 = vadd.f32 0.0, %v164
    %v166 = vpop.f32.mrf.mxu0
    %v167 = vpop.f32.mrf.mxu0
    %v168 = vpop.f32.mrf.mxu0
    %169 = vdwg.mxu0
    %v186 = vunpack.c.l.b16 %v50
    %v187 = vunpack.c.l.b16 %v51
    %v188 = vunpack.c.l.b16 %v52
    %v189 = vunpack.c.l.b16 %v53
    %v190 = vunpack.c.l.b16 %v54
    %v191 = vunpack.c.l.b16 %v55
    %v192 = vunpack.c.l.b16 %v56
    %v193 = vunpack.c.l.b16 %v57
    %v194 = vunpack.c.l.b16 %v58
    %v195 = vunpack.c.l.b16 %v59
    %v196 = vunpack.c.l.b16 %v60
    %v197 = vunpack.c.l.b16 %v61
    %v198 = vunpack.c.l.b16 %v62
    %v199 = vunpack.c.l.b16 %v63
    %v200 = vunpack.c.l.b16 %v64
    %v201 = vunpack.c.l.b16 %v65
    %v202 = vpack.c.b16 %v187, %v186
    %v203 = vpack.c.b16 %v189, %v188
    %v204 = vpack.c.b16 %v191, %v190
    %v205 = vpack.c.b16 %v193, %v192
    %v206 = vpack.c.b16 %v195, %v194
    %v207 = vpack.c.b16 %v197, %v196
    %v208 = vpack.c.b16 %v199, %v198
    %v209 = vpack.c.b16 %v201, %v200
    %218 = vmatprep.subr.bf16.mxu0 0
    %219 = vmatpush1.bf16.msra.mxu0 %v209
    %220 = vmatprep.subr.bf16.mxu0 0
    %221 = vmatpush1.bf16.msra.mxu0 %v208
    %222 = vmatprep.subr.bf16.mxu0 0
    %223 = vmatpush1.bf16.msra.mxu0 %v207
    %224 = vmatprep.subr.bf16.mxu0 0
    %225 = vmatpush1.bf16.msra.mxu0 %v206
    %226 = vmatprep.subr.bf16.mxu0 0
    %227 = vmatpush1.bf16.msra.mxu0 %v205
    %228 = vmatprep.subr.bf16.mxu0 0
    %229 = vmatpush1.bf16.msra.mxu0 %v204
    %230 = vmatprep.subr.bf16.mxu0 0
    %231 = vmatpush1.bf16.msra.mxu0 %v203
    %232 = vmatprep.subr.bf16.mxu0 0
    %233 = vmatpush1.bf16.msra.mxu0 %v202
    %234 = vmatprep.subr.bf16.mxu0 0
    %235 = vmatpush2.bf16.msra.mxu0 0
    %236 = vmatprep.subr.bf16.mxu0 0
    %237 = vmatpush2.bf16.msra.mxu0 0
    %238 = vmatprep.subr.bf16.mxu0 0
    %239 = vmatpush2.bf16.msra.mxu0 0
    %240 = vmatprep.subr.bf16.mxu0 0
    %241 = vmatpush2.bf16.msra.mxu0 0
    %242 = vmatprep.subr.bf16.mxu0 0
    %243 = vmatpush2.bf16.msra.mxu0 0
    %244 = vmatprep.subr.bf16.mxu0 0
    %245 = vmatpush2.bf16.msra.mxu0 0
    %246 = vmatprep.subr.bf16.mxu0 0
    %247 = vmatpush2.bf16.msra.mxu0 0
    %248 = vmatprep.subr.bf16.mxu0 0
    %249 = vmatpush2.bf16.msra.mxu0 0
    %250 = vmatprep.mubr.bf16.mxu0 0
    %251 = vmatmul.mubr.bf16.gmra.mxu0 %v47
    %v252 = vpop.f32.mrf.mxu0
    %v253 = vadd.f32 %v165, %v252
    %v254 = vpop.f32.mrf.mxu0
    %v255 = vpop.f32.mrf.mxu0
    %v256 = vpop.f32.mrf.mxu0
    %257 = vdwg.mxu0
    %258 = vst [vmem:[%s4] sm:$0xf] %v253
    // Predicated region
    $region26: #{hybrid_variable_projection.1} parent=1 // pred_check
      _
    $region27: #{hybrid_variable_projection.1} parent=1 // pred_check_branch
      %260 = sbr.rel (0) target = $region29
    $region28: #{hybrid_variable_projection.1} parent=1 // pred_region
      _
    $region29: #{hybrid_variable_projection.1} parent=1 // pred_fallthru
      _
    // Predicated region
    $region30: #{hybrid_variable_projection.1} parent=1 // pred_check
      _
    $region31: #{hybrid_variable_projection.1} parent=1 // pred_check_branch
      %262 = sbr.rel (0) target = $region33
    $region32: #{hybrid_variable_projection.1} parent=1 // pred_region
      _
    $region33: #{hybrid_variable_projection.1} parent=1 // pred_fallthru
      _
    %263 = vsyncpa [#allocation3], 1
    %264 = vsyncpa [#allocation5], 1

</llo_original>
